<compile_context>
chip_gen: v7x
topology: tpu7x:2x2x1
jax: 0.10.0
libtpu: 0.0.40
codegen_flags: <defaults>
</compile_context>

<pallas_src>
import functools
import numpy as np
import jax
import jax.numpy as jnp
from jax.experimental import pallas as pl
from jax.experimental.pallas import tpu as pltpu

# ----------------------------- problem sizes --------------------------------
BATCH       = 8
INPUT_SIZE  = 16
HIDDEN      = 32
N_QUBITS    = 4
N_LAYERS    = 2
DIM         = 2 ** N_QUBITS   # statevector dimension


# ------------------- host-side construction of the fixed unitary ------------
def _ry(theta):
    c, s = np.cos(theta / 2.0), np.sin(theta / 2.0)
    return np.array([[c, -s], [s, c]], dtype=np.float64)


def _embed(n, mats_by_wire):
    """kron of single-qubit mats, wire 0 = most-significant bit (PennyLane)."""
    out = np.array([[1.0]])
    for w in range(n):
        out = np.kron(out, mats_by_wire.get(w, np.eye(2)))
    return out


def _cnot(n, ctrl, tgt):
    P0 = np.array([[1.0, 0.0], [0.0, 0.0]])
    P1 = np.array([[0.0, 0.0], [0.0, 1.0]])
    X = np.array([[0.0, 1.0], [1.0, 0.0]])
    return (_embed(n, {ctrl: P0}) + _embed(n, {ctrl: P1, tgt: X}))


def build_fixed_unitary(weights, n_q, n_layers):
    """Circuit after data encoding: per layer RY(weights) on each wire, then CNOT chain."""
    U = np.eye(2 ** n_q)
    for layer in range(n_layers):
        for i in range(n_q):
            U = _embed(n_q, {i: _ry(weights[layer * n_q + i])}) @ U
        for i in range(n_q - 1):
            U = _cnot(n_q, i, i + 1) @ U
    return U


# ------------------------ host-side constant packing -------------------------
def _up8(v):
    return (v + 7) // 8 * 8


def pack_constants(w1, b1, w2, b2, m_fold, n_q):
    """Pack all kernel constants into one f32 buffer (single DMA).

    Layout (row offsets 8-aligned, static in-kernel slices):
      rows [0, hidden)           cols [0, in)      : w1^T
      rows [0, hidden)           col   in          : b1 (column)
      rows [r_w2, r_w2+n_q)      cols [0, hidden)  : w2^T
      rows [r_w2, r_w2+n_q)      col   hidden      : b2 (column)
      rows [r_m,  r_m+dim)       cols [0, dim)     : M = U^T diag(z) U
      rows [r_bits, r_bits+dim)  cols [0, n_q)     : bit table (wire 0 = MSB)
    """
    in_size, hidden = w1.shape
    dim = 2 ** n_q
    r_w2 = _up8(hidden)
    r_m = r_w2 + _up8(n_q)
    r_bits = r_m + _up8(dim)
    rows = r_bits + _up8(dim)
    cols = max(in_size + 1, hidden + 1, dim)

    buf = np.zeros((rows, cols), np.float32)
    buf[0:hidden, 0:in_size] = np.asarray(w1, np.float64).T
    buf[0:hidden, in_size] = np.asarray(b1, np.float64)
    buf[r_w2:r_w2 + n_q, 0:hidden] = np.asarray(w2, np.float64).T
    buf[r_w2:r_w2 + n_q, hidden] = np.asarray(b2, np.float64)
    buf[r_m:r_m + dim, 0:dim] = m_fold
    k = np.arange(dim)[:, None]
    j = np.arange(n_q)[None, :]
    buf[r_bits:r_bits + dim, 0:n_q] = (k >> (n_q - 1 - j)) & 1
    offs = dict(r_w2=r_w2, r_m=r_m, r_bits=r_bits, rows=rows, cols=cols)
    return buf, offs


# ------------------------------- Pallas kernel -------------------------------
def hqgnn_kernel(x_ref, const_ref, out_ref, *,
                 in_size, hidden, n_q, dim, tb, r_w2, r_m, r_bits):
    xt = x_ref[...]                                           # (in, TB), batch on lanes

    # static slices into the packed constant buffer
    w1t = const_ref[0:hidden, 0:in_size]                      # (hidden, in)
    b1 = const_ref[0:hidden, in_size:in_size + 1]             # (hidden, 1)
    w2t = const_ref[r_w2:r_w2 + n_q, 0:hidden]                # (n_q, hidden)
    b2 = const_ref[r_w2:r_w2 + n_q, hidden:hidden + 1]        # (n_q, 1)
    m = const_ref[r_m:r_m + dim, 0:dim]                       # (dim, dim)   = U^T diag(z) U
    bits = const_ref[r_bits:r_bits + dim, 0:n_q]              # (dim, n_q)

    # --- classical "graph" MLP, feature-major: N = TB lanes on every dot ------
    h = jnp.dot(w1t, xt, preferred_element_type=jnp.float32) + b1
    h = jnp.maximum(h, 0.0)
    g = jnp.dot(w2t, h, preferred_element_type=jnp.float32) + b2   # (n_q, TB)

    # --- RY angle encoding: theta = atan(g) + pi/2 ; need cos/sin(theta/2) ----
    # Exact algebraic identities (sqrt / rsqrt only, no transcendentals):
    #   phi = atan(g); cos(phi) = rsqrt(1+g^2)
    #   cos(phi/2) = sqrt((1+cos phi)/2),  sin(phi/2) = sign(g)*sqrt((1-cos phi)/2)
    #   theta/2 = phi/2 + pi/4  =>  cos = (ch - sh)/sqrt2 ; sin = (ch + sh)/sqrt2
    cos_phi = jax.lax.rsqrt(1.0 + g * g)
    ch = jnp.sqrt(jnp.maximum((1.0 + cos_phi) * 0.5, 0.0))
    sh = jnp.where(g >= 0.0, 1.0, -1.0) * jnp.sqrt(
        jnp.maximum((1.0 - cos_phi) * 0.5, 0.0))
    inv_sqrt2 = jnp.float32(0.7071067811865476)
    c = (ch - sh) * inv_sqrt2        # cos(theta/2), (n_q, TB)
    s = (ch + sh) * inv_sqrt2        # sin(theta/2), (n_q, TB)

    # --- product-state amplitudes, state index on sublanes, batch on lanes ----
    # psi0[k, b] = prod_j (bit_j(k) ? s[j,b] : c[j,b]), pure fmul/fma via bit table
    psi0 = jnp.ones((dim, tb), jnp.float32)
    for j in range(n_q):
        cj = c[j:j + 1, :]                    # (1, TB)
        dj = s[j:j + 1, :] - cj               # (1, TB)
        bj = bits[:, j:j + 1]                 # (dim, 1)
        psi0 = psi0 * (cj + bj * dj)

    # --- folded measurement: out_b = psi0_b^T M psi0_b -------------------------
    t = jnp.dot(m, psi0, preferred_element_type=jnp.float32)       # (dim, TB)
    rowsum = jnp.sum(psi0 * t, axis=0, keepdims=True)              # (1, TB)
    # lane-dense full-block store (sublane-broadcast the row of results)
    out_ref[...] = jnp.broadcast_to(rowsum, (8, tb))


# --------------------------------- wrapper ------------------------------------
def hqgnn_forward(x, w1, b1, w2, b2, u_fixed, n_q, *, tb=128):
    B, in_size = x.shape
    hidden = w1.shape[1]
    dim = 2 ** n_q

    # Fold the Z-sum measurement into the fixed unitary (float64 on the host).
    zsum = n_q - 2.0 * np.array([bin(i).count("1") for i in range(dim)],
                                dtype=np.float64)
    m_fold = u_fixed.T @ np.diag(zsum) @ u_fixed

    consts_np, off = pack_constants(w1, b1, w2, b2, m_fold, n_q)

    num_tiles = (B + tb - 1) // tb
    b_pad = num_tiles * tb
    xt = jnp.zeros((in_size, b_pad), jnp.float32).at[:, :B].set(
        jnp.asarray(x, jnp.float32).T)

    kernel = functools.partial(
        hqgnn_kernel, in_size=in_size, hidden=hidden, n_q=n_q, dim=dim, tb=tb,
        r_w2=off["r_w2"], r_m=off["r_m"], r_bits=off["r_bits"])

    out = pl.pallas_call(
        kernel,
        out_shape=jax.ShapeDtypeStruct((num_tiles * 8, tb), jnp.float32),
        grid_spec=pltpu.PrefetchScalarGridSpec(
            num_scalar_prefetch=0,
            grid=(num_tiles,),
            in_specs=[
                pl.BlockSpec((in_size, tb), lambda i: (0, i)),
                # constants: single buffer, constant index_map -> VMEM-resident
                pl.BlockSpec((off["rows"], off["cols"]), lambda i: (0, 0)),
            ],
            out_specs=pl.BlockSpec((8, tb), lambda i: (i, 0)),
        ),
        compiler_params=pltpu.CompilerParams(
            dimension_semantics=("parallel",)),
    )(xt, jnp.asarray(consts_np))

    # row 0 of each (8, TB) block carries the per-sample results
    return out.reshape(num_tiles, 8, tb)[:, 0, :].reshape(-1)[:B]


# ------------------------------ pure-JAX reference ----------------------------
def reference(x, w1, b1, w2, b2, u_fixed, n_q):
    h = jnp.maximum(x @ w1 + b1.reshape(1, -1), 0.0)
    g = h @ w2 + b2.reshape(1, -1)
    theta = jnp.arctan(g) + jnp.pi / 2.0
    c = jnp.cos(theta / 2.0)
    s = jnp.sin(theta / 2.0)
    dim = 2 ** n_q
    psi0 = jnp.ones((x.shape[0], dim), jnp.float32)
    k = np.arange(dim)
    for j in range(n_q):
        bit = jnp.asarray(((k >> (n_q - 1 - j)) & 1)[None, :])
        psi0 = psi0 * jnp.where(bit == 1, s[:, j:j + 1], c[:, j:j + 1])
    psi = psi0 @ jnp.asarray(u_fixed.T, jnp.float32)
    probs = psi * psi
    zvec = jnp.asarray(n_q - 2 * np.array([bin(i).count("1") for i in range(dim)]),
                       jnp.float32)
    return probs @ zvec


# ---------------------------------- main --------------------------------------
if __name__ == "__main__":
    key = jax.random.PRNGKey(0)
    kx, k1, k2, k3, k4, kq = jax.random.split(key, 6)

    x  = jax.random.normal(kx, (BATCH, INPUT_SIZE), jnp.float32)
    w1 = jax.random.normal(k1, (INPUT_SIZE, HIDDEN), jnp.float32) * 0.2
    b1 = jax.random.normal(k2, (HIDDEN,), jnp.float32) * 0.1
    w2 = jax.random.normal(k3, (HIDDEN, N_QUBITS), jnp.float32) * 0.2
    b2 = jax.random.normal(k4, (N_QUBITS,), jnp.float32) * 0.1
    qweights = np.asarray(
        jax.random.uniform(kq, (N_LAYERS * N_QUBITS,), jnp.float32,
                           minval=0.0, maxval=2.0 * np.pi), dtype=np.float64)

    u_fixed = build_fixed_unitary(qweights, N_QUBITS, N_LAYERS)

    out = hqgnn_forward(x, w1, b1, w2, b2, u_fixed, N_QUBITS)
    out = jax.block_until_ready(out)

    ref = reference(x, w1, b1, w2, b2, u_fixed, N_QUBITS)
    np.testing.assert_allclose(np.asarray(out), np.asarray(ref),
                               rtol=1e-4, atol=1e-4)
    print("KERNEL_OK")
</pallas_src>

<mosaic_0001>
module attributes {stable_mosaic.version = 11 : i64} {
  func.func @hqgnn_kernel(%arg0: i32, %arg1: memref<16x128xf32, #tpu.memory_space<vmem>>, %arg2: memref<72x33xf32, #tpu.memory_space<vmem>>, %arg3: memref<8x128xf32, #tpu.memory_space<vmem>>) attributes {dimension_semantics = [#tpu.dimension_semantics<parallel>], iteration_bounds = array<i64: 1>, scalar_prefetch = 0 : i64, scratch_operands = 0 : i64, tpu.core_type = #tpu.core_type<tc>, window_params = [{transform_indices = @transform_0, window_bounds = array<i64: 16, 128>}, {pipeline_mode = #tpu.pipeline_mode<synchronous>, transform_indices = @transform_1, window_bounds = array<i64: 72, 33>}, {transform_indices = @transform_2, window_bounds = array<i64: 8, 128>}]} {
    %c0 = arith.constant 0 : index
    %c0_0 = arith.constant 0 : index
    %0 = vector.load %arg1[%c0, %c0_0] : memref<16x128xf32, #tpu.memory_space<vmem>>, vector<16x128xf32>
    %c0_1 = arith.constant 0 : index
    %c0_2 = arith.constant 0 : index
    %1 = vector.load %arg2[%c0_1, %c0_2] : memref<72x33xf32, #tpu.memory_space<vmem>>, vector<32x16xf32>
    %c0_3 = arith.constant 0 : index
    %c16 = arith.constant 16 : index
    %2 = vector.load %arg2[%c0_3, %c16] : memref<72x33xf32, #tpu.memory_space<vmem>>, vector<32x1xf32>
    %c32 = arith.constant 32 : index
    %c0_4 = arith.constant 0 : index
    %3 = vector.load %arg2[%c32, %c0_4] : memref<72x33xf32, #tpu.memory_space<vmem>>, vector<4x32xf32>
    %c32_5 = arith.constant 32 : index
    %c32_6 = arith.constant 32 : index
    %4 = vector.load %arg2[%c32_5, %c32_6] : memref<72x33xf32, #tpu.memory_space<vmem>>, vector<4x1xf32>
    %c40 = arith.constant 40 : index
    %c0_7 = arith.constant 0 : index
    %5 = vector.load %arg2[%c40, %c0_7] : memref<72x33xf32, #tpu.memory_space<vmem>>, vector<16x16xf32>
    %c56 = arith.constant 56 : index
    %c0_8 = arith.constant 0 : index
    %6 = vector.load %arg2[%c56, %c0_8] : memref<72x33xf32, #tpu.memory_space<vmem>>, vector<16x4xf32>
    %cst = arith.constant dense<0.000000e+00> : vector<32x128xf32>
    %7 = tpu.matmul %1, %0, %cst {dimension_numbers = #tpu.dot_dimension_numbers<[1], [0], [0], [1], [0, 0, 1, 1], [], []>} : vector<32x16xf32>, vector<16x128xf32>, vector<32x128xf32> -> vector<32x128xf32>
    %8 = vector.broadcast %2 : vector<32x1xf32> to vector<32x128xf32>
    %9 = arith.addf %7, %8 : vector<32x128xf32>
    %cst_9 = arith.constant 0.000000e+00 : f32
    %10 = vector.broadcast %cst_9 : f32 to vector<32x128xf32>
    %11 = arith.maximumf %9, %10 : vector<32x128xf32>
    %cst_10 = arith.constant dense<0.000000e+00> : vector<4x128xf32>
    %12 = tpu.matmul %3, %11, %cst_10 {dimension_numbers = #tpu.dot_dimension_numbers<[1], [0], [0], [1], [0, 0, 1, 1], [], []>} : vector<4x32xf32>, vector<32x128xf32>, vector<4x128xf32> -> vector<4x128xf32>
    %13 = vector.broadcast %4 : vector<4x1xf32> to vector<4x128xf32>
    %14 = arith.addf %12, %13 : vector<4x128xf32>
    %15 = arith.mulf %14, %14 : vector<4x128xf32>
    %cst_11 = arith.constant 1.000000e+00 : f32
    %16 = vector.broadcast %cst_11 : f32 to vector<4x128xf32>
    %17 = arith.addf %16, %15 : vector<4x128xf32>
    %18 = math.rsqrt %17 : vector<4x128xf32>
    %cst_12 = arith.constant 1.000000e+00 : f32
    %19 = vector.broadcast %cst_12 : f32 to vector<4x128xf32>
    %20 = arith.addf %19, %18 : vector<4x128xf32>
    %cst_13 = arith.constant 5.000000e-01 : f32
    %21 = vector.broadcast %cst_13 : f32 to vector<4x128xf32>
    %22 = arith.mulf %20, %21 : vector<4x128xf32>
    %cst_14 = arith.constant 0.000000e+00 : f32
    %23 = vector.broadcast %cst_14 : f32 to vector<4x128xf32>
    %24 = arith.maximumf %22, %23 : vector<4x128xf32>
    %25 = math.sqrt %24 : vector<4x128xf32>
    %cst_15 = arith.constant 0.000000e+00 : f32
    %26 = vector.broadcast %cst_15 : f32 to vector<4x128xf32>
    %27 = arith.cmpf oge, %14, %26 : vector<4x128xf32>
    %cst_16 = arith.constant 1.000000e+00 : f32
    %cst_17 = arith.constant -1.000000e+00 : f32
    %28 = vector.broadcast %cst_16 : f32 to vector<4x128xf32>
    %29 = vector.broadcast %cst_17 : f32 to vector<4x128xf32>
    %30 = arith.select %27, %28, %29 : vector<4x128xi1>, vector<4x128xf32>
    %cst_18 = arith.constant 1.000000e+00 : f32
    %31 = vector.broadcast %cst_18 : f32 to vector<4x128xf32>
    %32 = arith.subf %31, %18 : vector<4x128xf32>
    %cst_19 = arith.constant 5.000000e-01 : f32
    %33 = vector.broadcast %cst_19 : f32 to vector<4x128xf32>
    %34 = arith.mulf %32, %33 : vector<4x128xf32>
    %cst_20 = arith.constant 0.000000e+00 : f32
    %35 = vector.broadcast %cst_20 : f32 to vector<4x128xf32>
    %36 = arith.maximumf %34, %35 : vector<4x128xf32>
    %37 = math.sqrt %36 : vector<4x128xf32>
    %38 = arith.mulf %30, %37 : vector<4x128xf32>
    %39 = arith.subf %25, %38 : vector<4x128xf32>
    %cst_21 = arith.constant 0.707106769 : f32
    %40 = vector.broadcast %cst_21 : f32 to vector<4x128xf32>
    %41 = arith.mulf %39, %40 : vector<4x128xf32>
    %42 = arith.addf %25, %38 : vector<4x128xf32>
    %cst_22 = arith.constant 0.707106769 : f32
    %43 = vector.broadcast %cst_22 : f32 to vector<4x128xf32>
    %44 = arith.mulf %42, %43 : vector<4x128xf32>
    %cst_23 = arith.constant 1.000000e+00 : f32
    %45 = vector.broadcast %cst_23 : f32 to vector<16x128xf32>
    %46 = vector.extract_strided_slice %41 {offsets = [0, 0], sizes = [1, 128], strides = [1, 1]} : vector<4x128xf32> to vector<1x128xf32>
    %47 = vector.extract_strided_slice %44 {offsets = [0, 0], sizes = [1, 128], strides = [1, 1]} : vector<4x128xf32> to vector<1x128xf32>
    %48 = arith.subf %47, %46 : vector<1x128xf32>
    %49 = vector.extract_strided_slice %6 {offsets = [0, 0], sizes = [16, 1], strides = [1, 1]} : vector<16x4xf32> to vector<16x1xf32>
    %50 = vector.broadcast %49 : vector<16x1xf32> to vector<16x128xf32>
    %51 = vector.broadcast %48 : vector<1x128xf32> to vector<16x128xf32>
    %52 = arith.mulf %50, %51 : vector<16x128xf32>
    %53 = vector.broadcast %46 : vector<1x128xf32> to vector<16x128xf32>
    %54 = arith.addf %53, %52 : vector<16x128xf32>
    %55 = arith.mulf %45, %54 : vector<16x128xf32>
    %56 = vector.extract_strided_slice %41 {offsets = [1, 0], sizes = [1, 128], strides = [1, 1]} : vector<4x128xf32> to vector<1x128xf32>
    %57 = vector.extract_strided_slice %44 {offsets = [1, 0], sizes = [1, 128], strides = [1, 1]} : vector<4x128xf32> to vector<1x128xf32>
    %58 = arith.subf %57, %56 : vector<1x128xf32>
    %59 = vector.extract_strided_slice %6 {offsets = [0, 1], sizes = [16, 1], strides = [1, 1]} : vector<16x4xf32> to vector<16x1xf32>
    %60 = vector.broadcast %59 : vector<16x1xf32> to vector<16x128xf32>
    %61 = vector.broadcast %58 : vector<1x128xf32> to vector<16x128xf32>
    %62 = arith.mulf %60, %61 : vector<16x128xf32>
    %63 = vector.broadcast %56 : vector<1x128xf32> to vector<16x128xf32>
    %64 = arith.addf %63, %62 : vector<16x128xf32>
    %65 = arith.mulf %55, %64 : vector<16x128xf32>
    %66 = vector.extract_strided_slice %41 {offsets = [2, 0], sizes = [1, 128], strides = [1, 1]} : vector<4x128xf32> to vector<1x128xf32>
    %67 = vector.extract_strided_slice %44 {offsets = [2, 0], sizes = [1, 128], strides = [1, 1]} : vector<4x128xf32> to vector<1x128xf32>
    %68 = arith.subf %67, %66 : vector<1x128xf32>
    %69 = vector.extract_strided_slice %6 {offsets = [0, 2], sizes = [16, 1], strides = [1, 1]} : vector<16x4xf32> to vector<16x1xf32>
    %70 = vector.broadcast %69 : vector<16x1xf32> to vector<16x128xf32>
    %71 = vector.broadcast %68 : vector<1x128xf32> to vector<16x128xf32>
    %72 = arith.mulf %70, %71 : vector<16x128xf32>
    %73 = vector.broadcast %66 : vector<1x128xf32> to vector<16x128xf32>
    %74 = arith.addf %73, %72 : vector<16x128xf32>
    %75 = arith.mulf %65, %74 : vector<16x128xf32>
    %76 = vector.extract_strided_slice %41 {offsets = [3, 0], sizes = [1, 128], strides = [1, 1]} : vector<4x128xf32> to vector<1x128xf32>
    %77 = vector.extract_strided_slice %44 {offsets = [3, 0], sizes = [1, 128], strides = [1, 1]} : vector<4x128xf32> to vector<1x128xf32>
    %78 = arith.subf %77, %76 : vector<1x128xf32>
    %79 = vector.extract_strided_slice %6 {offsets = [0, 3], sizes = [16, 1], strides = [1, 1]} : vector<16x4xf32> to vector<16x1xf32>
    %80 = vector.broadcast %79 : vector<16x1xf32> to vector<16x128xf32>
    %81 = vector.broadcast %78 : vector<1x128xf32> to vector<16x128xf32>
    %82 = arith.mulf %80, %81 : vector<16x128xf32>
    %83 = vector.broadcast %76 : vector<1x128xf32> to vector<16x128xf32>
    %84 = arith.addf %83, %82 : vector<16x128xf32>
    %85 = arith.mulf %75, %84 : vector<16x128xf32>
    %cst_24 = arith.constant dense<0.000000e+00> : vector<16x128xf32>
    %86 = tpu.matmul %5, %85, %cst_24 {dimension_numbers = #tpu.dot_dimension_numbers<[1], [0], [0], [1], [0, 0, 1, 1], [], []>} : vector<16x16xf32>, vector<16x128xf32>, vector<16x128xf32> -> vector<16x128xf32>
    %87 = arith.mulf %85, %86 : vector<16x128xf32>
    %cst_25 = arith.constant dense<0.000000e+00> : vector<128xf32>
    %88 = vector.multi_reduction <add>, %87, %cst_25 [0] : vector<16x128xf32> to vector<128xf32>
    %89 = vector.shape_cast %88 : vector<128xf32> to vector<1x128xf32>
    %90 = vector.shape_cast %89 : vector<1x128xf32> to vector<1x128xf32>
    %91 = vector.broadcast %90 : vector<1x128xf32> to vector<8x128xf32>
    %c0_26 = arith.constant 0 : index
    %c0_27 = arith.constant 0 : index
    %92 = vector.load %arg3[%c0_26, %c0_27] : memref<8x128xf32, #tpu.memory_space<vmem>>, vector<8x128xf32>
    tpu.vector_store %arg3[%c0_26, %c0_27], %91 {strides = array<i32>} : memref<8x128xf32, #tpu.memory_space<vmem>>, vector<8x128xf32>,
    return
  }
  func.func @transform_0(%arg0: i32) -> (i32, i32) {
    %c0_i32 = arith.constant 0 : i32
    %c0_i32_0 = arith.constant 0 : i32
    return %c0_i32, %arg0 : i32, i32
  }
  func.func @transform_1(%arg0: i32) -> (i32, i32) {
    %c0_i32 = arith.constant 0 : i32
    %c0_i32_0 = arith.constant 0 : i32
    %c0_i32_1 = arith.constant 0 : i32
    return %c0_i32, %c0_i32_0 : i32, i32
  }
  func.func @transform_2(%arg0: i32) -> (i32, i32) {
    %c0_i32 = arith.constant 0 : i32
    %c0_i32_0 = arith.constant 0 : i32
    return %arg0, %c0_i32 : i32, i32
  }
}

</mosaic_0001>

<llo_original>
// kernel: tpu_custom_call.1
$region0: #{tpu_custom_call.1}
  #allocation0 [shape = 'u32[]', space=smem, size = 0x4, offset = 0x4, fixed_abs, tag = 'smem constant byte address 0x4 - core index']
  #allocation1 [shape = 'u32[144,128]{1,0:T(1,128)}', space=vmem, size = 0x12000, scoped, tag = 'internal scratch']
  %s0 = inlined_call_operand.vmem [shape: f32[16,128], index: 0, kind: input, shape index: {}]
  %s1 = inlined_call_operand.vmem [shape: f32[72,33], index: 1, kind: input, shape index: {}]
  %s2 = inlined_call_operand.hbm [shape: f32[8,128], index: 2, kind: output, shape index: {}]
  %s3 = sld [smem:[#allocation0]]
  $region18: #{tpu_custom_call.1} parent=0
    _
  %s5 = ssub.s32 1, %s3
  %s6 = scalar_select 0, %s5, %s3
  $region1: #{tpu_custom_call.1} parent=0
    #allocation2 [shape = 'u8[4096]{0}', space=vmem, size = 0x1000, scoped, tag = 'output window, operand 0, single buffered']
    #allocation3 [shape = 's32[1]{0}', space=sflag, size = 0x4, scoped, tag = 'scoped memory for tpu_custom_call.1']
    %7 = vsyncpa [#allocation3], 0
    // Predicated region
    $region2: #{tpu_custom_call.1} parent=1 // pred_check
      _
    $region3: #{tpu_custom_call.1} parent=1 // pred_check_branch
      %9 = sbr.rel (0) target = $region5
    $region4: #{tpu_custom_call.1} parent=1 // pred_region
      _
    $region5: #{tpu_custom_call.1} parent=1 // pred_fallthru
      _
    // Predicated region
    $region6: #{tpu_custom_call.1} parent=1 // pred_check
      _
    $region7: #{tpu_custom_call.1} parent=1 // pred_check_branch
      %11 = sbr.rel (0) target = $region9
    $region8: #{tpu_custom_call.1} parent=1 // pred_region
      _
    $region9: #{tpu_custom_call.1} parent=1 // pred_fallthru
      _
    %v12 = vld [vmem:[%s0] sm:$0xff]
    %v13 = vld [vmem:[%s0 + $0x8] sm:$0xff]
    %v14 = vld [vmem:[%s1] sm:$0xff]
    %v15 = vld [vmem:[%s1 + $0x8] sm:$0xff]
    %v16 = vld [vmem:[%s1 + $0x10] sm:$0xff]
    %v17 = vld [vmem:[%s1 + $0x18] sm:$0xff]
    %v18 = vld [vmem:[%s1 + $0x20] sm:$0xf]
    %v19 = vld [vmem:[%s1 + $0x28] sm:$0xff]
    %v20 = vld [vmem:[%s1 + $0x30] sm:$0xff]
    %v21 = vld [vmem:[%s1 + $0x38] sm:$0xff]
    %v22 = vld [vmem:[%s1 + $0x40] sm:$0xff]
    %24 = vset.pattern.permute.xlu0 16
    %25 = vperm.xlu0 %24, %v14
    %v26 = vpop.permute.xlu0 %25
    %29 = vset.pattern.permute.xlu0 16
    %30 = vperm.xlu0 %29, %v15
    %v31 = vpop.permute.xlu0 %30
    %34 = vset.pattern.permute.xlu0 16
    %35 = vperm.xlu0 %34, %v16
    %v36 = vpop.permute.xlu0 %35
    %39 = vset.pattern.permute.xlu0 16
    %40 = vperm.xlu0 %39, %v17
    %v41 = vpop.permute.xlu0 %40
    %vm43 = vcmask 130048
    %v44 = vsel %vm43, %v14, 0
    %v46 = vsel %vm43, %v15, 0
    %v48 = vsel %vm43, %v16, 0
    %v50 = vsel %vm43, %v17, 0
    %52 = vmatprep.subr.mxu0 0.0
    %53 = vmatpush1.msra.mxu0 %v12
    %54 = vmatprep.subr.mxu0 0.0
    %55 = vmatpush1.msra.mxu0 %v13
    %56 = vmatprep.subr.mxu0 0.0
    %57 = vmatpush1.msra.mxu0 0.0
    %58 = vmatprep.subr.mxu0 0.0
    %59 = vmatpush1.msra.mxu0 0.0
    %60 = vmatprep.subr.mxu0 0.0
    %61 = vmatpush1.msra.mxu0 0.0
    %62 = vmatprep.subr.mxu0 0.0
    %63 = vmatpush1.msra.mxu0 0.0
    %64 = vmatprep.subr.mxu0 0.0
    %65 = vmatpush1.msra.mxu0 0.0
    %66 = vmatprep.subr.mxu0 0.0
    %67 = vmatpush1.msra.mxu0 0.0
    %68 = vmatprep.subr.mxu0 0.0
    %69 = vmatpush1.msra.mxu0 0.0
    %70 = vmatprep.subr.mxu0 0.0
    %71 = vmatpush1.msra.mxu0 0.0
    %72 = vmatprep.subr.mxu0 0.0
    %73 = vmatpush1.msra.mxu0 0.0
    %74 = vmatprep.subr.mxu0 0.0
    %75 = vmatpush1.msra.mxu0 0.0
    %76 = vmatprep.subr.mxu0 0.0
    %77 = vmatpush1.msra.mxu0 0.0
    %78 = vmatprep.subr.mxu0 0.0
    %79 = vmatpush1.msra.mxu0 0.0
    %80 = vmatprep.subr.mxu0 0.0
    %81 = vmatpush1.msra.mxu0 0.0
    %82 = vmatprep.subr.mxu0 0.0
    %83 = vmatpush1.msra.mxu0 0.0
    %84 = vmatprep.subr.mxu0 0.0
    %85 = vmatpush1.msra.mxu0 0.0
    %86 = vmatprep.subr.mxu0 0.0
    %87 = vmatpush1.msra.mxu0 0.0
    %88 = vmatprep.subr.mxu0 0.0
    %89 = vmatpush1.msra.mxu0 0.0
    %90 = vmatprep.subr.mxu0 0.0
    %91 = vmatpush1.msra.mxu0 0.0
    %92 = vmatprep.subr.mxu0 0.0
    %93 = vmatpush1.msra.mxu0 0.0
    %94 = vmatprep.subr.mxu0 0.0
    %95 = vmatpush1.msra.mxu0 0.0
    %96 = vmatprep.subr.mxu0 0.0
    %97 = vmatpush1.msra.mxu0 0.0
    %98 = vmatprep.subr.mxu0 0.0
    %99 = vmatpush1.msra.mxu0 0.0
    %100 = vmatprep.subr.mxu0 0.0
    %101 = vmatpush1.msra.mxu0 0.0
    %102 = vmatprep.subr.mxu0 0.0
    %103 = vmatpush1.msra.mxu0 0.0
    %104 = vmatprep.subr.mxu0 0.0
    %105 = vmatpush1.msra.mxu0 0.0
    %106 = vmatprep.subr.mxu0 0.0
    %107 = vmatpush1.msra.mxu0 0.0
    %108 = vmatprep.subr.mxu0 0.0
    %109 = vmatpush1.msra.mxu0 0.0
    %110 = vmatprep.subr.mxu0 0.0
    %111 = vmatpush1.msra.mxu0 0.0
    %112 = vmatprep.subr.mxu0 0.0
    %113 = vmatpush1.msra.mxu0 0.0
    %114 = vmatprep.subr.mxu0 0.0
    %115 = vmatpush1.msra.mxu0 0.0
    %116 = vmatprep.mubr.f32.mxu0 0.0
    %117 = vmatmul.mubr.f32.gmra.mrb[0].mxu0 %v44
    %v118 = vpop.f32.mrb[0].mxu0
    %v119 = vadd.f32 %v26, %v118
    %v120 = vpop.f32.mrb[0].mxu0
    %121 = vmatprep.mubr.f32.mxu0 0.0
    %122 = vmatmul.mubr.f32.gmra.mrb[0].mxu0 %v46
    %v123 = vpop.f32.mrb[0].mxu0
    %v124 = vadd.f32 %v31, %v123
    %v125 = vpop.f32.mrb[0].mxu0
    %126 = vmatprep.mubr.f32.mxu0 0.0
    %127 = vmatmul.mubr.f32.gmra.mrb[0].mxu0 %v48
    %v128 = vpop.f32.mrb[0].mxu0
    %v129 = vadd.f32 %v36, %v128
    %v130 = vpop.f32.mrb[0].mxu0
    %131 = vmatprep.mubr.f32.mxu0 0.0
    %132 = vmatmul.mubr.f32.gmra.mrb[0].mxu0 %v50
    %v133 = vpop.f32.mrb[0].mxu0
    %v134 = vadd.f32 %v41, %v133
    %v135 = vpop.f32.mrb[0].mxu0
    %136 = vdwg.mxu0
    %v137 = vmax.f32 %v119, 0.0
    %v138 = vmax.f32 %v124, 0.0
    %v139 = vmax.f32 %v129, 0.0
    %v140 = vmax.f32 %v134, 0.0
    %142 = vset.pattern.permute.xlu0 32
    %143 = vperm.xlu0 %142, %v18
    %v144 = vpop.permute.xlu0 %143
    %vm146 = vcmask 261120
    %v147 = vsel %vm146, %v18, 0
    %149 = vmatprep.subr.mxu0 0.0
    %150 = vmatpush1.msra.mxu0 %v137
    %151 = vmatprep.subr.mxu0 0.0
    %152 = vmatpush1.msra.mxu0 %v138
    %153 = vmatprep.subr.mxu0 0.0
    %154 = vmatpush1.msra.mxu0 %v139
    %155 = vmatprep.subr.mxu0 0.0
    %156 = vmatpush1.msra.mxu0 %v140
    %157 = vmatprep.subr.mxu0 0.0
    %158 = vmatpush1.msra.mxu0 0.0
    %159 = vmatprep.subr.mxu0 0.0
    %160 = vmatpush1.msra.mxu0 0.0
    %161 = vmatprep.subr.mxu0 0.0
    %162 = vmatpush1.msra.mxu0 0.0
    %163 = vmatprep.subr.mxu0 0.0
    %164 = vmatpush1.msra.mxu0 0.0
    %165 = vmatprep.subr.mxu0 0.0
    %166 = vmatpush1.msra.mxu0 0.0
    %167 = vmatprep.subr.mxu0 0.0
    %168 = vmatpush1.msra.mxu0 0.0
    %169 = vmatprep.subr.mxu0 0.0
    %170 = vmatpush1.msra.mxu0 0.0
    %171 = vmatprep.subr.mxu0 0.0
    %172 = vmatpush1.msra.mxu0 0.0
    %173 = vmatprep.subr.mxu0 0.0
    %174 = vmatpush1.msra.mxu0 0.0
    %175 = vmatprep.subr.mxu0 0.0
    %176 = vmatpush1.msra.mxu0 0.0
    %177 = vmatprep.subr.mxu0 0.0
    %178 = vmatpush1.msra.mxu0 0.0
    %179 = vmatprep.subr.mxu0 0.0
    %180 = vmatpush1.msra.mxu0 0.0
    %181 = vmatprep.subr.mxu0 0.0
    %182 = vmatpush1.msra.mxu0 0.0
    %183 = vmatprep.subr.mxu0 0.0
    %184 = vmatpush1.msra.mxu0 0.0
    %185 = vmatprep.subr.mxu0 0.0
    %186 = vmatpush1.msra.mxu0 0.0
    %187 = vmatprep.subr.mxu0 0.0
    %188 = vmatpush1.msra.mxu0 0.0
    %189 = vmatprep.subr.mxu0 0.0
    %190 = vmatpush1.msra.mxu0 0.0
    %191 = vmatprep.subr.mxu0 0.0
    %192 = vmatpush1.msra.mxu0 0.0
    %193 = vmatprep.subr.mxu0 0.0
    %194 = vmatpush1.msra.mxu0 0.0
    %195 = vmatprep.subr.mxu0 0.0
    %196 = vmatpush1.msra.mxu0 0.0
    %197 = vmatprep.subr.mxu0 0.0
    %198 = vmatpush1.msra.mxu0 0.0
    %199 = vmatprep.subr.mxu0 0.0
    %200 = vmatpush1.msra.mxu0 0.0
    %201 = vmatprep.subr.mxu0 0.0
    %202 = vmatpush1.msra.mxu0 0.0
    %203 = vmatprep.subr.mxu0 0.0
    %204 = vmatpush1.msra.mxu0 0.0
    %205 = vmatprep.subr.mxu0 0.0
    %206 = vmatpush1.msra.mxu0 0.0
    %207 = vmatprep.subr.mxu0 0.0
    %208 = vmatpush1.msra.mxu0 0.0
    %209 = vmatprep.subr.mxu0 0.0
    %210 = vmatpush1.msra.mxu0 0.0
    %211 = vmatprep.subr.mxu0 0.0
    %212 = vmatpush1.msra.mxu0 0.0
    %213 = vmatprep.mubr.f32.mxu0 0.0
    %214 = vmatmul.mubr.f32.gmra.mrb[0].mxu0 %v147
    %v215 = vpop.f32.mrb[0].mxu0
    %v216 = vadd.f32 %v144, %v215
    %v217 = vpop.f32.mrb[0].mxu0
    %218 = vdwg.mxu0
    %v219 = vmul.f32 %v216, %v216
    %v220 = vadd.f32 %v219, 1.0
    %v221 = vrsqrt.pop %v220
    %v222 = vadd.f32 %v221, 1.0
    %v223 = vmul.f32 %v222, 0.5
    %v224 = vmax.f32 %v223, 0.0
    %v225 = vrsqrt.pop %v224
    %v226 = vmul.f32 %v224, %v225
    %vm227 = vcmp.eq.f32.partialorder %v224, inf
    %v228 = vsel %vm227, %v224, %v226
    %vm229 = vcmp.eq.f32.partialorder %v224, 0.0
    %v230 = vand.u32 %v224, 2147483648
    %v231 = vsel %vm229, %v230, %v228
    %vm232 = vcmp.ge.f32.partialorder %v216, 0.0
    %v233 = vsel %vm232, 1.0, -1.0
    %v234 = vsub.f32 1.0, %v221
    %v235 = vmul.f32 %v234, 0.5
    %v236 = vmax.f32 %v235, 0.0
    %v237 = vrsqrt.pop %v236
    %v238 = vmul.f32 %v236, %v237
    %vm239 = vcmp.eq.f32.partialorder %v236, inf
    %v240 = vsel %vm239, %v236, %v238
    %vm241 = vcmp.eq.f32.partialorder %v236, 0.0
    %v242 = vand.u32 %v236, 2147483648
    %v243 = vsel %vm241, %v242, %v240
    %v244 = vmul.f32 %v233, %v243
    %v245 = vsub.f32 %v231, %v244
    %v246 = vmul.f32 %v245, 0.70710677
    %v247 = vadd.f32 %v231, %v244
    %v248 = vmul.f32 %v247, 0.70710677
    %v249 = vsub.f32 %v248, %v246
    %251 = vset.pattern.permute.xlu0 0
    %252 = vperm.xlu0 %251, %v21
    %v253 = vpop.permute.xlu0 %252
    %256 = vset.pattern.permute.xlu0 0
    %257 = vperm.xlu0 %256, %v22
    %v258 = vpop.permute.xlu0 %257
    %v260 = vlaneseq
    %v261 = vshrl.u32 %v260, 7
    %v262 = vsub.s32 0, %v261
    %v263 = vrot.slane %v249, %v262
    %v264 = vmul.f32 %v253, %v263
    %v265 = vmul.f32 %v258, %v263
    %v266 = vlaneseq
    %v267 = vshrl.u32 %v266, 7
    %v268 = vsub.s32 0, %v267
    %v269 = vrot.slane %v246, %v268
    %v270 = vadd.f32 %v269, %v264
    %v271 = vadd.f32 %v269, %v265
    %272 = vset.pattern.permute.xlu0 1
    %273 = vperm.xlu0 %272, %v21
    %v274 = vpop.permute.xlu0 %273
    %276 = vset.pattern.permute.xlu0 1
    %277 = vperm.xlu0 %276, %v22
    %v278 = vpop.permute.xlu0 %277
    %v280 = vlaneseq
    %v281 = vshrl.u32 %v280, 7
    %v282 = vsub.s32 1, %v281
    %v283 = vrot.slane %v249, %v282
    %v284 = vmul.f32 %v274, %v283
    %v285 = vmul.f32 %v278, %v283
    %v286 = vlaneseq
    %v287 = vshrl.u32 %v286, 7
    %v288 = vsub.s32 1, %v287
    %v289 = vrot.slane %v246, %v288
    %v290 = vadd.f32 %v289, %v284
    %v291 = vadd.f32 %v289, %v285
    %v292 = vmul.f32 %v270, %v290
    %v293 = vmul.f32 %v271, %v291
    %294 = vset.pattern.permute.xlu0 2
    %295 = vperm.xlu0 %294, %v21
    %v296 = vpop.permute.xlu0 %295
    %298 = vset.pattern.permute.xlu0 2
    %299 = vperm.xlu0 %298, %v22
    %v300 = vpop.permute.xlu0 %299
    %v302 = vlaneseq
    %v303 = vshrl.u32 %v302, 7
    %v304 = vsub.s32 2, %v303
    %v305 = vrot.slane %v249, %v304
    %v306 = vmul.f32 %v296, %v305
    %v307 = vmul.f32 %v300, %v305
    %v308 = vlaneseq
    %v309 = vshrl.u32 %v308, 7
    %v310 = vsub.s32 2, %v309
    %v311 = vrot.slane %v246, %v310
    %v312 = vadd.f32 %v311, %v306
    %v313 = vadd.f32 %v311, %v307
    %v314 = vmul.f32 %v292, %v312
    %v315 = vmul.f32 %v293, %v313
    %316 = vset.pattern.permute.xlu0 3
    %317 = vperm.xlu0 %316, %v21
    %v318 = vpop.permute.xlu0 %317
    %320 = vset.pattern.permute.xlu0 3
    %321 = vperm.xlu0 %320, %v22
    %v322 = vpop.permute.xlu0 %321
    %v324 = vlaneseq
    %v325 = vshrl.u32 %v324, 7
    %v326 = vsub.s32 3, %v325
    %v327 = vrot.slane %v249, %v326
    %v328 = vmul.f32 %v318, %v327
    %v329 = vmul.f32 %v322, %v327
    %v330 = vlaneseq
    %v331 = vshrl.u32 %v330, 7
    %v332 = vsub.s32 3, %v331
    %v333 = vrot.slane %v246, %v332
    %v334 = vadd.f32 %v333, %v328
    %v335 = vadd.f32 %v333, %v329
    %v336 = vmul.f32 %v314, %v334
    %v337 = vmul.f32 %v315, %v335
    %v339 = vsel %vm43, %v19, 0
    %v342 = vsel %vm43, %v20, 0
    %344 = vmatprep.subr.mxu0 0.0
    %345 = vmatpush1.msra.mxu0 %v336
    %346 = vmatprep.subr.mxu0 0.0
    %347 = vmatpush1.msra.mxu0 %v337
    %348 = vmatprep.subr.mxu0 0.0
    %349 = vmatpush1.msra.mxu0 0.0
    %350 = vmatprep.subr.mxu0 0.0
    %351 = vmatpush1.msra.mxu0 0.0
    %352 = vmatprep.subr.mxu0 0.0
    %353 = vmatpush1.msra.mxu0 0.0
    %354 = vmatprep.subr.mxu0 0.0
    %355 = vmatpush1.msra.mxu0 0.0
    %356 = vmatprep.subr.mxu0 0.0
    %357 = vmatpush1.msra.mxu0 0.0
    %358 = vmatprep.subr.mxu0 0.0
    %359 = vmatpush1.msra.mxu0 0.0
    %360 = vmatprep.subr.mxu0 0.0
    %361 = vmatpush1.msra.mxu0 0.0
    %362 = vmatprep.subr.mxu0 0.0
    %363 = vmatpush1.msra.mxu0 0.0
    %364 = vmatprep.subr.mxu0 0.0
    %365 = vmatpush1.msra.mxu0 0.0
    %366 = vmatprep.subr.mxu0 0.0
    %367 = vmatpush1.msra.mxu0 0.0
    %368 = vmatprep.subr.mxu0 0.0
    %369 = vmatpush1.msra.mxu0 0.0
    %370 = vmatprep.subr.mxu0 0.0
    %371 = vmatpush1.msra.mxu0 0.0
    %372 = vmatprep.subr.mxu0 0.0
    %373 = vmatpush1.msra.mxu0 0.0
    %374 = vmatprep.subr.mxu0 0.0
    %375 = vmatpush1.msra.mxu0 0.0
    %376 = vmatprep.subr.mxu0 0.0
    %377 = vmatpush1.msra.mxu0 0.0
    %378 = vmatprep.subr.mxu0 0.0
    %379 = vmatpush1.msra.mxu0 0.0
    %380 = vmatprep.subr.mxu0 0.0
    %381 = vmatpush1.msra.mxu0 0.0
    %382 = vmatprep.subr.mxu0 0.0
    %383 = vmatpush1.msra.mxu0 0.0
    %384 = vmatprep.subr.mxu0 0.0
    %385 = vmatpush1.msra.mxu0 0.0
    %386 = vmatprep.subr.mxu0 0.0
    %387 = vmatpush1.msra.mxu0 0.0
    %388 = vmatprep.subr.mxu0 0.0
    %389 = vmatpush1.msra.mxu0 0.0
    %390 = vmatprep.subr.mxu0 0.0
    %391 = vmatpush1.msra.mxu0 0.0
    %392 = vmatprep.subr.mxu0 0.0
    %393 = vmatpush1.msra.mxu0 0.0
    %394 = vmatprep.subr.mxu0 0.0
    %395 = vmatpush1.msra.mxu0 0.0
    %396 = vmatprep.subr.mxu0 0.0
    %397 = vmatpush1.msra.mxu0 0.0
    %398 = vmatprep.subr.mxu0 0.0
    %399 = vmatpush1.msra.mxu0 0.0
    %400 = vmatprep.subr.mxu0 0.0
    %401 = vmatpush1.msra.mxu0 0.0
    %402 = vmatprep.subr.mxu0 0.0
    %403 = vmatpush1.msra.mxu0 0.0
    %404 = vmatprep.subr.mxu0 0.0
    %405 = vmatpush1.msra.mxu0 0.0
    %406 = vmatprep.subr.mxu0 0.0
    %407 = vmatpush1.msra.mxu0 0.0
    %408 = vmatprep.mubr.f32.mxu0 0.0
    %409 = vmatmul.mubr.f32.gmra.mrb[0].mxu0 %v339
    %v410 = vpop.f32.mrb[0].mxu0
    %v411 = vadd.f32 0.0, %v410
    %v412 = vpop.f32.mrb[0].mxu0
    %413 = vmatprep.mubr.f32.mxu0 0.0
    %414 = vmatmul.mubr.f32.gmra.mrb[0].mxu0 %v342
    %v415 = vpop.f32.mrb[0].mxu0
    %v416 = vadd.f32 0.0, %v415
    %v417 = vpop.f32.mrb[0].mxu0
    %418 = vdwg.mxu0
    %v419 = vmul.f32 %v336, %v411
    %v420 = vmul.f32 %v337, %v416
    %v421 = vadd.f32 %v419, %v420
    %v422 = vrot.slane %v421, 4
    %v423 = vadd.f32 %v421, %v422
    %v424 = vrot.slane %v423, 2
    %v425 = vadd.f32 %v423, %v424
    %v426 = vrot.slane %v425, 1
    %v427 = vadd.f32 %v425, %v426
    %428 = vst [vmem:[#allocation2] sm:$0xff] %v427
    // Predicated region
    $region10: #{tpu_custom_call.1} parent=1 // pred_check
      _
    $region11: #{tpu_custom_call.1} parent=1 // pred_check_branch
      %430 = sbr.rel (0) target = $region13
    $region12: #{tpu_custom_call.1} parent=1 // pred_region
      %s432 = ssub.s32 128, 128
      %433 = vsyncadd [#allocation3], %s432
      %s435 = sshll.u32 [#allocation2], 4
      %s436 = int_to_ptr.vmem [resolvable:$true] %s435
      %438 = dma.vmem_to_hbm [thread:$0]  %s436, 128, %s2, [#allocation3]
    $region13: #{tpu_custom_call.1} parent=1 // pred_fallthru
      _
    // Predicated region
    $region14: #{tpu_custom_call.1} parent=1 // pred_check
      _
    $region15: #{tpu_custom_call.1} parent=1 // pred_check_branch
      %440 = sbr.rel (0) target = $region17
    $region16: #{tpu_custom_call.1} parent=1 // pred_region
      %441 = dma.done [#allocation3], 128
    $region17: #{tpu_custom_call.1} parent=1 // pred_fallthru
      _
    %442 = vsyncpa [#allocation3], 1

</llo_original>
